<compile_context>
chip_gen: v7x
topology: tpu7x:2x2x1
jax: 0.10.0
libtpu: 0.0.40
codegen_flags: <defaults>
</compile_context>

<pallas_src>
import math
from typing import NamedTuple

import jax
import jax.numpy as jnp
from jax.experimental import pallas as pl
from jax.experimental.pallas import tpu as pltpu


def _round_up(x: int, m: int) -> int:
    return ((x + m - 1) // m) * m


def _sublane(dtype) -> int:
    """Minimum second-minor tile granularity: f32 -> 8, bf16 -> 16, int8/fp8 -> 32."""
    itemsize = jnp.dtype(dtype).itemsize
    if itemsize >= 4:
        return 8
    if itemsize == 2:
        return 16
    return 32


class PreparedWeight(NamedTuple):
    """Init-time weight layout for hyper_linear (do this ONCE, not per call)."""
    w_kn: jax.Array        # [Kp, Np]: weight.T, zero-padded to tile multiples
    out_features: int
    in_features: int
    tn: int                # N (output-feature) tile
    tk: int                # K (reduction) tile


def prepare_hyper_linear_weight(weight, *, tn=None, tk=1024, dtype=None) -> PreparedWeight:
    """One-time layout transform of the PyTorch-convention weight [Out, In].

    * transposes to [In, Out] so the kernel feeds canonical (tk, tn) RHS tiles
      to the MXU (no per-K-step transpose),
    * zero-pads to tile multiples ONCE (no per-call HBM->HBM pad of the weight),
    * optionally casts once to a compute dtype (e.g. bf16).
    """
    Out, In = weight.shape
    np_min = _round_up(Out, 128)    # lane granularity (same on v5e/v6e/v7x)
    kp_min = _round_up(In, 128)

    if tn is None:
        tn = min(512, np_min)
        # v7x megacore: keep >= 2 N tiles when it costs no extra padding, so both
        # TensorCores get work even when the batch fits a single M tile
        # (the common small-batch hypernetwork case).
        if np_min > 128 and np_min // tn < 2:
            half = np_min // 2
            tn = half if half % 128 == 0 else 128
    else:
        tn = min(_round_up(tn, 128), np_min)
    tk = min(_round_up(tk, 128), kp_min)

    Np = _round_up(Out, tn)
    Kp = _round_up(In, tk)

    w_kn = weight.T                                  # [In, Out]
    if (Kp, Np) != (In, Out):
        w_kn = jnp.pad(w_kn, ((0, Kp - In), (0, Np - Out)))
    if dtype is not None:
        w_kn = w_kn.astype(dtype)
    return PreparedWeight(w_kn=w_kn, out_features=Out, in_features=In, tn=tn, tk=tk)


def _hl_kernel_f32_out(x_ref, w_ref, b_ref, o_ref):
    # x_ref: [tm, tk], w_ref: [tk, tn] (pre-transposed weight), b_ref: SMEM f32[1],
    # o_ref: [tm, tn] f32 — K-resident (index_map (i, j)) and used directly as the
    # accumulator: no scratch, no final copy.
    k = pl.program_id(2)
    p = jnp.dot(x_ref[...], w_ref[...], preferred_element_type=jnp.float32)

    @pl.when(k == 0)
    def _():
        o_ref[...] = p + b_ref[0]

    @pl.when(k != 0)
    def _():
        o_ref[...] += p


def _hl_kernel_acc(x_ref, w_ref, b_ref, o_ref, acc_ref):
    # Narrow-output (bf16/fp8) variant: f32 VMEM scratch accumulator, single cast
    # + bias add in the finalize step.
    k = pl.program_id(2)

    @pl.when(k == 0)
    def _():
        acc_ref[...] = jnp.zeros_like(acc_ref)

    acc_ref[...] += jnp.dot(x_ref[...], w_ref[...], preferred_element_type=jnp.float32)

    @pl.when(k == pl.num_programs(2) - 1)
    def _():
        o_ref[...] = (acc_ref[...] + b_ref[0]).astype(o_ref.dtype)


def _block_spec(shape, index_map, extra_buffering: bool):
    if extra_buffering:
        try:
            return pl.BlockSpec(shape, index_map, pipeline_mode=pl.Buffered(3))
        except TypeError:       # jax build without pipeline_mode: use default depth
            pass
    return pl.BlockSpec(shape, index_map)


def hyper_linear(x, weight, bias=0.0, *, tm=512, out_dtype=None,
                 allow_xla_small_fallback=False):
    """y = x @ W^T + bias (PyTorch F.linear semantics with scalar bias broadcast).

    x:      [B, In]
    weight: PreparedWeight (preferred; init-time layout) or raw [Out, In] array
            (convenience path — pays the layout transform per call).
    bias:   python scalar / 0-d array (the module's bias_value), or None.
    tm:     M tile; raise it (e.g. 1024) for very large batches to cut weight
            re-streaming (weight HBM traffic scales with ceil(B / tm)).
    """
    if not isinstance(weight, PreparedWeight):
        weight = prepare_hyper_linear_weight(weight)      # slow per-call path

    B, In = x.shape
    assert In == weight.in_features, "in_features mismatch"
    Out = weight.out_features
    w_kn = weight.w_kn
    Kp, Np = w_kn.shape
    tn, tk = weight.tn, weight.tk

    in_dtype = x.dtype
    out_dtype = jnp.dtype(out_dtype) if out_dtype is not None else jnp.dtype(in_dtype)

    bias_val = 0.0 if bias is None else bias
    b_arr = jnp.asarray(bias_val, dtype=jnp.float32).reshape(1)   # SMEM scalar

    # Match the compute dtype chosen at weight-prep time (e.g. bf16).
    if x.dtype != w_kn.dtype:
        x = x.astype(w_kn.dtype)

    # Optional fast path: for sub-tile problems XLA's fused matmul wins outright.
    if allow_xla_small_fallback and B * In * Out <= 128 * 128 * 128:
        y = jnp.dot(x, w_kn[:In, :Out], preferred_element_type=jnp.float32)
        return (y + b_arr[0]).astype(out_dtype)

    # Dtype-aware sublane granularity for the M tile.
    sub = _sublane(x.dtype)
    tm = min(_round_up(tm, sub), _round_up(B, sub))
    Mp = _round_up(B, tm)

    # Only x (small in the hypernetwork regime) is padded per call; K padding is
    # exact (0 * 0 contributions).
    if (Mp, Kp) != (B, In):
        x = jnp.pad(x, ((0, Mp - B), (0, Kp - In)))

    grid = (Mp // tm, Np // tn, Kp // tk)
    n_k = grid[2]

    use_scratch = out_dtype != jnp.dtype(jnp.float32)
    kernel = _hl_kernel_acc if use_scratch else _hl_kernel_f32_out
    scratch = [pltpu.VMEM((tm, tn), jnp.float32)] if use_scratch else []

    # Deeper input buffering only when there are enough K steps to hide behind.
    extra_buf = n_k > 2

    itemsize = lambda d: jnp.dtype(d).itemsize
    n_buf = 3 if extra_buf else 2
    vmem_bytes = (n_buf * (tm * tk * itemsize(x.dtype) + tk * tn * itemsize(w_kn.dtype))
                  + 2 * tm * tn * itemsize(out_dtype)
                  + (tm * tn * 4 if use_scratch else 0))
    vmem_limit = max(32 * 1024 * 1024,
                     min(int(vmem_bytes * 1.3) + (2 << 20), 96 * 1024 * 1024))

    cost = pl.CostEstimate(
        flops=2 * B * In * Out,
        transcendentals=0,
        bytes_accessed=int(grid[1] * Mp * Kp * itemsize(x.dtype)        # x per N tile
                           + grid[0] * Kp * Np * itemsize(w_kn.dtype)   # W per M tile
                           + Mp * Np * itemsize(out_dtype)),
    )

    out = pl.pallas_call(
        kernel,
        out_shape=jax.ShapeDtypeStruct((Mp, Np), out_dtype),
        grid_spec=pltpu.PrefetchScalarGridSpec(
            num_scalar_prefetch=0,
            grid=grid,
            in_specs=[
                _block_spec((tm, tk), lambda i, j, k: (i, k), extra_buf),   # x
                _block_spec((tk, tn), lambda i, j, k: (k, j), extra_buf),   # W^T tiles
                pl.BlockSpec(memory_space=pltpu.MemorySpace.SMEM),          # scalar bias
            ],
            out_specs=pl.BlockSpec((tm, tn), lambda i, j, k: (i, j)),
            scratch_shapes=scratch,
        ),
        compiler_params=pltpu.CompilerParams(
            dimension_semantics=("parallel", "parallel", "arbitrary"),
            vmem_limit_bytes=vmem_limit),
        cost_estimate=cost,
    )(x, w_kn, b_arr)

    if (Mp, Np) != (B, Out):
        out = out[:B, :Out]
    return out


def init_hyper_linear_params(key, in_features, out_features, bias_value=0.0,
                             dtype=jnp.float32):
    """Re-implementation of HyperLinear.__init__.

    weight: kaiming_uniform_(a=sqrt(5)) -> U(-1/sqrt(fan_in), 1/sqrt(fan_in)),
            PyTorch [Out, In] layout.
    bias  : the module's scalar bias_value (broadcast in the forward).
    """
    bound = 1.0 / math.sqrt(in_features)
    weight = jax.random.uniform(key, (out_features, in_features),
                                minval=-bound, maxval=bound, dtype=dtype)
    return weight, float(bias_value)


if __name__ == "__main__":
    key = jax.random.PRNGKey(0)
    k_w, k_x, k_w2, k_x2 = jax.random.split(key, 4)

    # --- Case 1: module-sized tiny problem (grid (1,1,1), f32 direct path) ---
    B, In, Out, bias_value = 8, 32, 16, 0.5
    w, b = init_hyper_linear_params(k_w, In, Out, bias_value=bias_value)
    wp = prepare_hyper_linear_weight(w)                  # once, at "init" time
    x = jax.random.normal(k_x, (B, In), dtype=jnp.float32)
    y = jax.block_until_ready(hyper_linear(x, wp, b))
    y_ref = x @ w.T + b
    assert y.shape == (B, Out)
    assert jnp.allclose(y, y_ref, atol=1e-5, rtol=1e-5), "mismatch (tiny f32)"

    # --- Case 2: multi-tile (M, N, K) grid, f32 output accumulated in-place ---
    B2, In2, Out2 = 32, 384, 256
    w2, b2 = init_hyper_linear_params(k_w2, In2, Out2, bias_value=0.25)
    wp2 = prepare_hyper_linear_weight(w2, tk=128)        # grid (2, 2, 3), Buffered(3)
    x2 = jax.random.normal(k_x2, (B2, In2), dtype=jnp.float32)
    y2 = jax.block_until_ready(hyper_linear(x2, wp2, b2, tm=16))
    y2_ref = x2 @ w2.T + b2
    assert jnp.allclose(y2, y2_ref, atol=1e-4, rtol=1e-4), "mismatch (tiled f32)"

    # --- Case 3: bf16 compute/output path (f32 scratch accumulator kernel) ---
    wp3 = prepare_hyper_linear_weight(w2, tk=128, dtype=jnp.bfloat16)
    x3 = x2.astype(jnp.bfloat16)
    y3 = jax.block_until_ready(hyper_linear(x3, wp3, b2, tm=16))
    assert y3.dtype == jnp.bfloat16
    assert jnp.allclose(y3.astype(jnp.float32), y2_ref, atol=0.1, rtol=0.05), \
        "mismatch (bf16)"

    print("KERNEL_OK")
</pallas_src>

<mosaic_0001>
module attributes {stable_mosaic.version = 11 : i64} {
  func.func @_hl_kernel_f32_out(%arg0: i32, %arg1: i32, %arg2: i32, %arg3: memref<8x128xf32, #tpu.memory_space<vmem>>, %arg4: memref<128x128xf32, #tpu.memory_space<vmem>>, %arg5: memref<1xf32, #tpu.memory_space<smem>>, %arg6: memref<8x128xf32, #tpu.memory_space<vmem>>) attributes {dimension_semantics = [#tpu.dimension_semantics<parallel>, #tpu.dimension_semantics<parallel>, #tpu.dimension_semantics<arbitrary>], iteration_bounds = array<i64: 1, 1, 1>, scalar_prefetch = 0 : i64, scratch_operands = 0 : i64, tpu.core_type = #tpu.core_type<tc>, window_params = [{transform_indices = @transform_0, window_bounds = array<i64: 8, 128>}, {transform_indices = @transform_1, window_bounds = array<i64: 128, 128>}, {transform_indices = @transform_2, window_bounds = array<i64: 1>}, {transform_indices = @transform_3, window_bounds = array<i64: 8, 128>}]} {
    %c0 = arith.constant 0 : index
    %c0_0 = arith.constant 0 : index
    %0 = vector.load %arg3[%c0, %c0_0] : memref<8x128xf32, #tpu.memory_space<vmem>>, vector<8x128xf32>
    %c0_1 = arith.constant 0 : index
    %c0_2 = arith.constant 0 : index
    %1 = vector.load %arg4[%c0_1, %c0_2] : memref<128x128xf32, #tpu.memory_space<vmem>>, vector<128x128xf32>
    %cst = arith.constant dense<0.000000e+00> : vector<8x128xf32>
    %2 = tpu.matmul %0, %1, %cst {dimension_numbers = #tpu.dot_dimension_numbers<[1], [0], [0], [1], [0, 0, 1, 1], [], []>} : vector<8x128xf32>, vector<128x128xf32>, vector<8x128xf32> -> vector<8x128xf32>
    %c0_i32 = arith.constant 0 : i32
    %3 = arith.cmpi eq, %arg2, %c0_i32 : i32
    %4 = arith.extui %3 : i1 to i32
    %c0_i32_3 = arith.constant 0 : i32
    %5 = arith.cmpi ne, %4, %c0_i32_3 : i32
    scf.if %5 {
      %c0_6 = arith.constant 0 : index
      %9 = memref.load %arg5[%c0_6] : memref<1xf32, #tpu.memory_space<smem>>
      %10 = vector.broadcast %9 : f32 to vector<8x128xf32>
      %11 = arith.addf %2, %10 : vector<8x128xf32>
      %c0_7 = arith.constant 0 : index
      %c0_8 = arith.constant 0 : index
      %12 = vector.load %arg6[%c0_7, %c0_8] : memref<8x128xf32, #tpu.memory_space<vmem>>, vector<8x128xf32>
      tpu.vector_store %arg6[%c0_7, %c0_8], %11 {strides = array<i32>} : memref<8x128xf32, #tpu.memory_space<vmem>>, vector<8x128xf32>,
    } else {
    }
    %c0_i32_4 = arith.constant 0 : i32
    %6 = arith.cmpi ne, %arg2, %c0_i32_4 : i32
    %7 = arith.extui %6 : i1 to i32
    %c0_i32_5 = arith.constant 0 : i32
    %8 = arith.cmpi ne, %7, %c0_i32_5 : i32
    scf.if %8 {
      %c0_6 = arith.constant 0 : index
      %c0_7 = arith.constant 0 : index
      %9 = vector.load %arg6[%c0_6, %c0_7] : memref<8x128xf32, #tpu.memory_space<vmem>>, vector<8x128xf32>
      %10 = arith.addf %9, %2 : vector<8x128xf32>
      %c0_8 = arith.constant 0 : index
      %c0_9 = arith.constant 0 : index
      %11 = vector.load %arg6[%c0_8, %c0_9] : memref<8x128xf32, #tpu.memory_space<vmem>>, vector<8x128xf32>
      tpu.vector_store %arg6[%c0_8, %c0_9], %10 {strides = array<i32>} : memref<8x128xf32, #tpu.memory_space<vmem>>, vector<8x128xf32>,
    } else {
    }
    return
  }
  func.func @transform_0(%arg0: i32, %arg1: i32, %arg2: i32) -> (i32, i32) {
    %c0_i32 = arith.constant 0 : i32
    return %arg0, %arg2 : i32, i32
  }
  func.func @transform_1(%arg0: i32, %arg1: i32, %arg2: i32) -> (i32, i32) {
    %c0_i32 = arith.constant 0 : i32
    return %arg2, %arg1 : i32, i32
  }
  func.func @transform_2(%arg0: i32, %arg1: i32, %arg2: i32) -> i32 {
    %c0_i32 = arith.constant 0 : i32
    %c0_i32_0 = arith.constant 0 : i32
    return %c0_i32 : i32
  }
  func.func @transform_3(%arg0: i32, %arg1: i32, %arg2: i32) -> (i32, i32) {
    %c0_i32 = arith.constant 0 : i32
    return %arg0, %arg1 : i32, i32
  }
}

</mosaic_0001>

<llo_original>
// kernel: tpu_custom_call.1
$region0: #{tpu_custom_call.1}
  #allocation0 [shape = 'u32[]', space=smem, size = 0x4, offset = 0x4, fixed_abs, tag = 'smem constant byte address 0x4 - core index']
  #allocation1 [shape = 'u32[144,128]{1,0:T(1,128)}', space=vmem, size = 0x12000, scoped, tag = 'internal scratch']
  #allocation2 [shape = 'f32[1]{0:T(128)S(6)}', space=smem, size = 0x200, scoped, tag = 'scoped memory for tpu_custom_call.1']
  %s0 = inlined_call_operand.hbm [shape: f32[8,128], index: 0, kind: input, shape index: {}]
  %s1 = inlined_call_operand.hbm [shape: f32[128,128], index: 1, kind: input, shape index: {}]
  %s2 = inlined_call_operand.<no memory space> [shape: f32[1], index: 2, kind: input, shape index: {}]
  %s3 = inlined_call_operand.hbm [shape: f32[8,128], index: 3, kind: output, shape index: {}]
  %s4 = sld [smem:[#allocation0]]
  $region38: #{tpu_custom_call.1} parent=0
    _
  %s6 = ssub.s32 1, %s4
  %s7 = scalar_select 0, %s6, %s4
  %8 = sst [smem:[#allocation2]] %s2
  $region1: #{tpu_custom_call.1} parent=0
    #allocation3 [shape = 'u8[4096]{0}', space=vmem, size = 0x1000, scoped, tag = 'input window, operand 0, single buffered']
    #allocation4 [shape = 's32[1]{0}', space=sflag, size = 0x4, scoped, tag = 'scoped memory for tpu_custom_call.1']
    #allocation5 [shape = 's32[1]{0}', space=sflag, size = 0x4, scoped, tag = 'scoped memory for tpu_custom_call.1']
    #allocation6 [shape = 'u8[65536]{0}', space=vmem, size = 0x10000, scoped, tag = 'input window, operand 1, single buffered']
    #allocation7 [shape = 's32[1]{0}', space=sflag, size = 0x4, scoped, tag = 'scoped memory for tpu_custom_call.1']
    #allocation8 [shape = 'u8[4096]{0}', space=vmem, size = 0x1000, scoped, tag = 'output window, operand 0, single buffered']
    %9 = vsyncpa [#allocation4], 0
    %10 = vsyncpa [#allocation7], 0
    %11 = vsyncpa [#allocation5], 0
    // Predicated region
    $region2: #{tpu_custom_call.1} parent=1 // pred_check
      _
    $region3: #{tpu_custom_call.1} parent=1 // pred_check_branch
      %13 = sbr.rel (0) target = $region5
    $region4: #{tpu_custom_call.1} parent=1 // pred_region
      %s15 = ssub.s32 128, 128
      %16 = vsyncadd [#allocation4], %s15
      %s18 = sshll.u32 [#allocation3], 4
      %s19 = int_to_ptr.vmem [resolvable:$true] %s18
      %21 = dma.hbm_to_vmem [thread:$0]  %s0, 128, %s19, [#allocation4]
    $region5: #{tpu_custom_call.1} parent=1 // pred_fallthru
      _
    // Predicated region
    $region6: #{tpu_custom_call.1} parent=1 // pred_check
      _
    $region7: #{tpu_custom_call.1} parent=1 // pred_check_branch
      %23 = sbr.rel (0) target = $region9
    $region8: #{tpu_custom_call.1} parent=1 // pred_region
      %s25 = ssub.s32 2048, 2048
      %26 = vsyncadd [#allocation7], %s25
      %s27 = sshll.u32 [#allocation6], 4
      %s28 = int_to_ptr.vmem [resolvable:$true] %s27
      %33 = dma.hbm_to_vmem [thread:$0]  %s1, 2048, %s28, [#allocation7], 128, 128, 8
    $region9: #{tpu_custom_call.1} parent=1 // pred_fallthru
      _
    // Predicated region
    $region10: #{tpu_custom_call.1} parent=1 // pred_check
      _
    $region11: #{tpu_custom_call.1} parent=1 // pred_check_branch
      %35 = sbr.rel (0) target = $region13
    $region12: #{tpu_custom_call.1} parent=1 // pred_region
      _
    $region13: #{tpu_custom_call.1} parent=1 // pred_fallthru
      _
    // Predicated region
    $region14: #{tpu_custom_call.1} parent=1 // pred_check
      _
    $region15: #{tpu_custom_call.1} parent=1 // pred_check_branch
      %37 = sbr.rel (0) target = $region17
    $region16: #{tpu_custom_call.1} parent=1 // pred_region
      %38 = dma.done [#allocation4], 128
    $region17: #{tpu_custom_call.1} parent=1 // pred_fallthru
      _
    // Predicated region
    $region18: #{tpu_custom_call.1} parent=1 // pred_check
      _
    $region19: #{tpu_custom_call.1} parent=1 // pred_check_branch
      %40 = sbr.rel (0) target = $region21
    $region20: #{tpu_custom_call.1} parent=1 // pred_region
      %41 = dma.done [#allocation7], 2048
    $region21: #{tpu_custom_call.1} parent=1 // pred_fallthru
      _
    %v42 = vld [vmem:[#allocation3] sm:$0xff]
    %v43 = vld [vmem:[#allocation6] sm:$0xff]
    %v44 = vld [vmem:[#allocation6 + $0x8] sm:$0xff]
    %v45 = vld [vmem:[#allocation6 + $0x10] sm:$0xff]
    %v46 = vld [vmem:[#allocation6 + $0x18] sm:$0xff]
    %v47 = vld [vmem:[#allocation6 + $0x20] sm:$0xff]
    %v48 = vld [vmem:[#allocation6 + $0x28] sm:$0xff]
    %v49 = vld [vmem:[#allocation6 + $0x30] sm:$0xff]
    %v50 = vld [vmem:[#allocation6 + $0x38] sm:$0xff]
    %v51 = vld [vmem:[#allocation6 + $0x40] sm:$0xff]
    %v52 = vld [vmem:[#allocation6 + $0x48] sm:$0xff]
    %v53 = vld [vmem:[#allocation6 + $0x50] sm:$0xff]
    %v54 = vld [vmem:[#allocation6 + $0x58] sm:$0xff]
    %v55 = vld [vmem:[#allocation6 + $0x60] sm:$0xff]
    %v56 = vld [vmem:[#allocation6 + $0x68] sm:$0xff]
    %v57 = vld [vmem:[#allocation6 + $0x70] sm:$0xff]
    %v58 = vld [vmem:[#allocation6 + $0x78] sm:$0xff]
    %59 = vmatprep.subr.mxu0 0.0
    %60 = vmatpush1.msra.mxu0 %v43
    %61 = vmatprep.subr.mxu0 0.0
    %62 = vmatpush1.msra.mxu0 %v44
    %63 = vmatprep.subr.mxu0 0.0
    %64 = vmatpush1.msra.mxu0 %v45
    %65 = vmatprep.subr.mxu0 0.0
    %66 = vmatpush1.msra.mxu0 %v46
    %67 = vmatprep.subr.mxu0 0.0
    %68 = vmatpush1.msra.mxu0 %v47
    %69 = vmatprep.subr.mxu0 0.0
    %70 = vmatpush1.msra.mxu0 %v48
    %71 = vmatprep.subr.mxu0 0.0
    %72 = vmatpush1.msra.mxu0 %v49
    %73 = vmatprep.subr.mxu0 0.0
    %74 = vmatpush1.msra.mxu0 %v50
    %75 = vmatprep.subr.mxu0 0.0
    %76 = vmatpush1.msra.mxu0 %v51
    %77 = vmatprep.subr.mxu0 0.0
    %78 = vmatpush1.msra.mxu0 %v52
    %79 = vmatprep.subr.mxu0 0.0
    %80 = vmatpush1.msra.mxu0 %v53
    %81 = vmatprep.subr.mxu0 0.0
    %82 = vmatpush1.msra.mxu0 %v54
    %83 = vmatprep.subr.mxu0 0.0
    %84 = vmatpush1.msra.mxu0 %v55
    %85 = vmatprep.subr.mxu0 0.0
    %86 = vmatpush1.msra.mxu0 %v56
    %87 = vmatprep.subr.mxu0 0.0
    %88 = vmatpush1.msra.mxu0 %v57
    %89 = vmatprep.subr.mxu0 0.0
    %90 = vmatpush1.msra.mxu0 %v58
    %91 = vmatprep.subr.mxu0 0.0
    %92 = vmatpush1.msra.mxu0 0.0
    %93 = vmatprep.subr.mxu0 0.0
    %94 = vmatpush1.msra.mxu0 0.0
    %95 = vmatprep.subr.mxu0 0.0
    %96 = vmatpush1.msra.mxu0 0.0
    %97 = vmatprep.subr.mxu0 0.0
    %98 = vmatpush1.msra.mxu0 0.0
    %99 = vmatprep.subr.mxu0 0.0
    %100 = vmatpush1.msra.mxu0 0.0
    %101 = vmatprep.subr.mxu0 0.0
    %102 = vmatpush1.msra.mxu0 0.0
    %103 = vmatprep.subr.mxu0 0.0
    %104 = vmatpush1.msra.mxu0 0.0
    %105 = vmatprep.subr.mxu0 0.0
    %106 = vmatpush1.msra.mxu0 0.0
    %107 = vmatprep.subr.mxu0 0.0
    %108 = vmatpush1.msra.mxu0 0.0
    %109 = vmatprep.subr.mxu0 0.0
    %110 = vmatpush1.msra.mxu0 0.0
    %111 = vmatprep.subr.mxu0 0.0
    %112 = vmatpush1.msra.mxu0 0.0
    %113 = vmatprep.subr.mxu0 0.0
    %114 = vmatpush1.msra.mxu0 0.0
    %115 = vmatprep.subr.mxu0 0.0
    %116 = vmatpush1.msra.mxu0 0.0
    %117 = vmatprep.subr.mxu0 0.0
    %118 = vmatpush1.msra.mxu0 0.0
    %119 = vmatprep.subr.mxu0 0.0
    %120 = vmatpush1.msra.mxu0 0.0
    %121 = vmatprep.subr.mxu0 0.0
    %122 = vmatpush1.msra.mxu0 0.0
    %123 = vmatprep.mubr.f32.mxu0 0.0
    %124 = vmatmul.mubr.f32.gmra.mrb[0].mxu0 %v42
    %v125 = vpop.f32.mrb[0].mxu0
    %v126 = vadd.f32 0.0, %v125
    %v127 = vpop.f32.mrb[0].mxu0
    %128 = vdwg.mxu0
    %p129 = scmp.eq.s32.totalorder 0, 0
    // Predicated region
    $region22: #{tpu_custom_call.1} parent=1 // pred_check
      %p130 = pneg %p129
    $region23: #{tpu_custom_call.1} parent=1 // pred_check_branch
      %132 = sbr.rel (%p130) target = $region25
    $region24: #{tpu_custom_call.1} parent=1 // pred_region
      %s133 = sld [smem:[#allocation2]]
      %v134 = vstv %s133
      %v135 = vadd.f32 %v126, %v134
      %136 = vst [vmem:[#allocation8] sm:$0xff] %v135
    $region25: #{tpu_custom_call.1} parent=1 // pred_fallthru
      _
    %p137 = scmp.ne.s32.totalorder 0, 0
    // Predicated region
    $region26: #{tpu_custom_call.1} parent=1 // pred_check
      %p138 = pneg %p137
    $region27: #{tpu_custom_call.1} parent=1 // pred_check_branch
      %140 = sbr.rel (%p138) target = $region29
    $region28: #{tpu_custom_call.1} parent=1 // pred_region
      %v141 = vld [vmem:[#allocation8] sm:$0xff]
      %v142 = vadd.f32 %v141, %v126
      %143 = vst [vmem:[#allocation8] sm:$0xff] %v142
    $region29: #{tpu_custom_call.1} parent=1 // pred_fallthru
      _
    // Predicated region
    $region30: #{tpu_custom_call.1} parent=1 // pred_check
      _
    $region31: #{tpu_custom_call.1} parent=1 // pred_check_branch
      %145 = sbr.rel (0) target = $region33
    $region32: #{tpu_custom_call.1} parent=1 // pred_region
      %s147 = ssub.s32 128, 128
      %148 = vsyncadd [#allocation5], %s147
      %s150 = sshll.u32 [#allocation8], 4
      %s151 = int_to_ptr.vmem [resolvable:$true] %s150
      %153 = dma.vmem_to_hbm [thread:$0]  %s151, 128, %s3, [#allocation5]
    $region33: #{tpu_custom_call.1} parent=1 // pred_fallthru
      _
    // Predicated region
    $region34: #{tpu_custom_call.1} parent=1 // pred_check
      _
    $region35: #{tpu_custom_call.1} parent=1 // pred_check_branch
      %155 = sbr.rel (0) target = $region37
    $region36: #{tpu_custom_call.1} parent=1 // pred_region
      %156 = dma.done [#allocation5], 128
    $region37: #{tpu_custom_call.1} parent=1 // pred_fallthru
      _
    %157 = vsyncpa [#allocation4], 1
    %158 = vsyncpa [#allocation7], 1
    %159 = vsyncpa [#allocation5], 1

</llo_original>
